<compile_context>
chip_gen: v7x
topology: tpu7x:2x2x1
jax: 0.10.0
libtpu: 0.0.40
codegen_flags: <defaults>
</compile_context>

<pallas_src>
import jax
import jax.numpy as jnp
from jax.experimental import pallas as pl
from jax.experimental.pallas import tpu as pltpu

_T = 128                      # tile is (_T, _T) elements of the flattened sorted arrays
_TILE = _T * _T               # 16384 elements per grid step


# ------------------------- Lovasz-hinge flat loss (tiled) -------------------------
def _lovasz_flat_kernel(gts_ref, err_ref, gt_ref, loss_ref, carry_ref):
    """One grid step: a (_T, _T) row-major tile of descending-sorted errors/labels."""
    i = pl.program_id(0)

    @pl.when(i == 0)
    def _():
        loss_ref[...] = jnp.zeros_like(loss_ref)
        carry_ref[...] = jnp.zeros_like(carry_ref)

    err = err_ref[...]                       # (_T, _T) f32, errors sorted descending
    gt = gt_ref[...]                         # (_T, _T) f32 in {0, 1}

    # Shared iotas: triangular constants + flat positions.
    r = jax.lax.broadcasted_iota(jnp.int32, (_T, _T), 0)
    c = jax.lax.broadcasted_iota(jnp.int32, (_T, _T), 1)
    tri_incl = (r <= c).astype(jnp.bfloat16)     # upper-triangular incl. diagonal
    tri_strict = (c < r).astype(jnp.bfloat16)    # strictly lower-triangular

    # ---- tile-local inclusive cumsum in row-major order (two MXU matmuls) ----
    # 0/1 values are exact in bf16 and accumulation is f32 -> exact integer counts.
    gt_bf = gt.astype(jnp.bfloat16)
    row_cum = jnp.dot(gt_bf, tri_incl, preferred_element_type=jnp.float32)   # within-row cumsum
    row_tot = jnp.broadcast_to(row_cum[:, _T - 1:_T], (_T, _T))              # each lane = row total
    tile_prefix = jnp.dot(tri_strict, row_tot.astype(jnp.bfloat16),
                          preferred_element_type=jnp.float32)                # sum of previous rows

    carry = carry_ref[...]                   # (1,1): gt seen in previous tiles
    cum_incl = carry + tile_prefix + row_cum # cumsum(gt) inclusive, global
    cum_excl = cum_incl - gt                 # cumsum(gt) exclusive (no 2nd triangular matmul)

    # Global 0-based flat position of every element (f32, exact up to 2^24 elements).
    base = (i * _TILE).astype(jnp.float32)
    pos_excl = base + r.astype(jnp.float32) * float(_T) + c.astype(jnp.float32)
    pos_incl = pos_excl + 1.0

    gts = gts_ref[0]                         # total number of positives (scalar, SMEM)

    # jaccard[p] = 1 - (gts - cumsum(gt)[p]) / (gts + cumsum(1-gt)[p]);  cumsum(1-gt) = pos - cumsum(gt)
    jac = 1.0 - (gts - cum_incl) / (gts + pos_incl - cum_incl)
    is_first = (pos_excl == 0.0).astype(jnp.float32)
    # guard the p==0 denominator so the all-negative (gts == 0) case never creates a NaN
    jac_prev = 1.0 - (gts - cum_excl) / (gts + pos_excl - cum_excl + is_first)
    jac_prev = jac_prev * (1.0 - is_first)   # grad[0] = jaccard[0]
    grad = jac - jac_prev                    # lovasz_grad(gt_sorted)

    # loss += dot(relu(errors_sorted), grad) over this tile
    loss_ref[...] += jnp.sum(jnp.maximum(err, 0.0) * grad, keepdims=True)
    # running total of gt = inclusive cumsum at the last element of the tile
    carry_ref[...] = cum_incl[_T - 1:_T, _T - 1:_T]


# ---------------------------------- Wrapper ----------------------------------
def lovasz_hinge_loss(outputs, targets):
    """Equivalent of LovaszHingeLoss().forward(outputs, targets) (per_image=False)."""
    logits = outputs.reshape(-1).astype(jnp.float32)
    labels = targets.reshape(-1).astype(jnp.float32)
    n = logits.shape[0]

    # Hinge errors in plain JAX; XLA fuses this into the sort input.
    errors = 1.0 - logits * (2.0 * labels - 1.0)

    # TODO(synk): descending sort has no clean Pallas TPU primitive; use one
    # multi-operand XLA sort (key = -errors) so labels ride along without gathers.
    neg_sorted, gt_sorted = jax.lax.sort((-errors, labels), num_keys=1)
    errors_sorted = -neg_sorted

    gts = jnp.sum(labels).reshape(1)         # total positives, passed via SMEM

    # Pad to whole (_T, _T) tiles. Padded errors are 0 (relu -> no contribution)
    # and padded labels are 0 (cumsums/jaccard stay finite), so the loss is unchanged.
    num_tiles = -(-n // _TILE)
    pad = num_tiles * _TILE - n
    err2d = jnp.pad(errors_sorted, (0, pad)).reshape(num_tiles * _T, _T)
    gt2d = jnp.pad(gt_sorted, (0, pad)).reshape(num_tiles * _T, _T)

    loss = pl.pallas_call(
        _lovasz_flat_kernel,
        out_shape=jax.ShapeDtypeStruct((1, 1), jnp.float32),
        grid=(num_tiles,),
        in_specs=[
            pl.BlockSpec(memory_space=pltpu.MemorySpace.SMEM),   # gts scalar
            pl.BlockSpec((_T, _T), lambda i: (i, 0)),            # sorted errors tile
            pl.BlockSpec((_T, _T), lambda i: (i, 0)),            # permuted labels tile
        ],
        out_specs=pl.BlockSpec((1, 1), lambda i: (0, 0)),        # resident accumulator
        scratch_shapes=[pltpu.VMEM((1, 1), jnp.float32)],        # running cumsum carry
        compiler_params=pltpu.CompilerParams(
            dimension_semantics=("arbitrary",)),
    )(gts, err2d, gt2d)
    return loss[0, 0]


# ----------------------------- Pure-JAX reference -----------------------------
def _lovasz_ref(outputs, targets):
    logits = outputs.reshape(-1).astype(jnp.float32)
    labels = targets.reshape(-1).astype(jnp.float32)
    signs = 2.0 * labels - 1.0
    errors = 1.0 - logits * signs
    order = jnp.argsort(-errors)
    errors_sorted = errors[order]
    gt_sorted = labels[order]
    gts = gt_sorted.sum()
    intersection = gts - jnp.cumsum(gt_sorted)
    union = gts + jnp.cumsum(1.0 - gt_sorted)
    jaccard = 1.0 - intersection / union
    grad = jnp.concatenate([jaccard[:1], jaccard[1:] - jaccard[:-1]])
    return jnp.sum(jnp.maximum(errors_sorted, 0.0) * grad)


if __name__ == "__main__":
    key = jax.random.PRNGKey(0)
    k1, k2 = jax.random.split(key)
    B, C, H, W = 2, 4, 16, 16                                    # N = 2048 pixels
    outputs = jax.random.normal(k1, (B, C, H, W), dtype=jnp.float32)            # logits
    targets = (jax.random.uniform(k2, (B, C, H, W)) > 0.5).astype(jnp.float32)  # binary masks

    fn = jax.jit(lovasz_hinge_loss)

    loss = jax.block_until_ready(fn(outputs, targets))
    ref = _lovasz_ref(outputs, targets)
    assert jnp.allclose(loss, ref, rtol=1e-4, atol=1e-5), (loss, ref)

    # all-negative mask edge case (gts == 0): exercises the NaN guard
    zeros = jnp.zeros_like(targets)
    loss0 = jax.block_until_ready(fn(outputs, zeros))
    ref0 = _lovasz_ref(outputs, zeros)
    assert jnp.isfinite(loss0) and jnp.allclose(loss0, ref0, rtol=1e-4, atol=1e-5), (loss0, ref0)

    print("KERNEL_OK")
</pallas_src>

<mosaic_0001>
module attributes {stable_mosaic.version = 11 : i64} {
  func.func @_lovasz_flat_kernel(%arg0: i32, %arg1: memref<1xf32, #tpu.memory_space<smem>>, %arg2: memref<128x128xf32, #tpu.memory_space<vmem>>, %arg3: memref<128x128xf32, #tpu.memory_space<vmem>>, %arg4: memref<1x1xf32, #tpu.memory_space<vmem>>, %arg5: memref<1x1xf32, #tpu.memory_space<vmem>>) attributes {dimension_semantics = [#tpu.dimension_semantics<arbitrary>], iteration_bounds = array<i64: 1>, scalar_prefetch = 0 : i64, scratch_operands = 1 : i64, tpu.core_type = #tpu.core_type<tc>, window_params = [{transform_indices = @transform_0, window_bounds = array<i64: 1>}, {transform_indices = @transform_1, window_bounds = array<i64: 128, 128>}, {transform_indices = @transform_2, window_bounds = array<i64: 128, 128>}, {pipeline_mode = #tpu.pipeline_mode<synchronous>, transform_indices = @transform_3, window_bounds = array<i64: 1, 1>}]} {
    %c0_i32 = arith.constant 0 : i32
    %0 = arith.cmpi eq, %arg0, %c0_i32 : i32
    %1 = arith.extui %0 : i1 to i32
    %c0_i32_0 = arith.constant 0 : i32
    %2 = arith.cmpi ne, %1, %c0_i32_0 : i32
    scf.if %2 {
      %cst_22 = arith.constant 0.000000e+00 : f32
      %77 = vector.broadcast %cst_22 : f32 to vector<1x1xf32>
      %c0_23 = arith.constant 0 : index
      %c0_24 = arith.constant 0 : index
      %78 = vector.load %arg4[%c0_23, %c0_24] : memref<1x1xf32, #tpu.memory_space<vmem>>, vector<1x1xf32>
      tpu.vector_store %arg4[%c0_23, %c0_24], %77 {strides = array<i32>} : memref<1x1xf32, #tpu.memory_space<vmem>>, vector<1x1xf32>,
      %cst_25 = arith.constant 0.000000e+00 : f32
      %79 = vector.broadcast %cst_25 : f32 to vector<1x1xf32>
      %c0_26 = arith.constant 0 : index
      %c0_27 = arith.constant 0 : index
      %80 = vector.load %arg5[%c0_26, %c0_27] : memref<1x1xf32, #tpu.memory_space<vmem>>, vector<1x1xf32>
      tpu.vector_store %arg5[%c0_26, %c0_27], %79 {strides = array<i32>} : memref<1x1xf32, #tpu.memory_space<vmem>>, vector<1x1xf32>,
    } else {
    }
    %c0 = arith.constant 0 : index
    %c0_1 = arith.constant 0 : index
    %3 = vector.load %arg2[%c0, %c0_1] : memref<128x128xf32, #tpu.memory_space<vmem>>, vector<128x128xf32>
    %c0_2 = arith.constant 0 : index
    %c0_3 = arith.constant 0 : index
    %4 = vector.load %arg3[%c0_2, %c0_3] : memref<128x128xf32, #tpu.memory_space<vmem>>, vector<128x128xf32>
    %5 = tpu.iota {dimensions = array<i32: 0>} : vector<128x128xi32>
    %6 = tpu.iota {dimensions = array<i32: 1>} : vector<128x128xi32>
    %7 = arith.cmpi sle, %5, %6 : vector<128x128xi32>
    %8 = arith.extui %7 : vector<128x128xi1> to vector<128x128xi32>
    %9 = arith.sitofp %8 : vector<128x128xi32> to vector<128x128xf32>
    %10 = arith.truncf %9 : vector<128x128xf32> to vector<128x128xbf16>
    %11 = arith.cmpi slt, %6, %5 : vector<128x128xi32>
    %12 = arith.extui %11 : vector<128x128xi1> to vector<128x128xi32>
    %13 = arith.sitofp %12 : vector<128x128xi32> to vector<128x128xf32>
    %14 = arith.truncf %13 : vector<128x128xf32> to vector<128x128xbf16>
    %15 = arith.truncf %4 : vector<128x128xf32> to vector<128x128xbf16>
    %cst = arith.constant dense<0.000000e+00> : vector<128x128xf32>
    %16 = tpu.matmul %15, %10, %cst {dimension_numbers = #tpu.dot_dimension_numbers<[1], [0], [0], [1], [0, 0, 1, 1], [], []>} : vector<128x128xbf16>, vector<128x128xbf16>, vector<128x128xf32> -> vector<128x128xf32>
    %17 = vector.extract_strided_slice %16 {offsets = [0, 127], sizes = [128, 1], strides = [1, 1]} : vector<128x128xf32> to vector<128x1xf32>
    %18 = vector.shape_cast %17 : vector<128x1xf32> to vector<128x1xf32>
    %19 = vector.broadcast %18 : vector<128x1xf32> to vector<128x128xf32>
    %20 = arith.truncf %19 : vector<128x128xf32> to vector<128x128xbf16>
    %cst_4 = arith.constant dense<0.000000e+00> : vector<128x128xf32>
    %21 = tpu.matmul %14, %20, %cst_4 {dimension_numbers = #tpu.dot_dimension_numbers<[1], [0], [0], [1], [0, 0, 1, 1], [], []>} : vector<128x128xbf16>, vector<128x128xbf16>, vector<128x128xf32> -> vector<128x128xf32>
    %c0_5 = arith.constant 0 : index
    %c0_6 = arith.constant 0 : index
    %22 = vector.load %arg5[%c0_5, %c0_6] : memref<1x1xf32, #tpu.memory_space<vmem>>, vector<1x1xf32>
    %23 = vector.broadcast %22 : vector<1x1xf32> to vector<128x128xf32>
    %24 = arith.addf %23, %21 : vector<128x128xf32>
    %25 = arith.addf %24, %16 : vector<128x128xf32>
    %26 = arith.subf %25, %4 : vector<128x128xf32>
    %c16384_i32 = arith.constant 16384 : i32
    %27 = arith.muli %arg0, %c16384_i32 : i32
    %28 = arith.sitofp %27 : i32 to f32
    %29 = arith.sitofp %5 : vector<128x128xi32> to vector<128x128xf32>
    %cst_7 = arith.constant 1.280000e+02 : f32
    %30 = vector.broadcast %cst_7 : f32 to vector<128x128xf32>
    %31 = arith.mulf %29, %30 : vector<128x128xf32>
    %32 = vector.broadcast %28 : f32 to vector<128x128xf32>
    %33 = arith.addf %32, %31 : vector<128x128xf32>
    %34 = arith.sitofp %6 : vector<128x128xi32> to vector<128x128xf32>
    %35 = arith.addf %33, %34 : vector<128x128xf32>
    %cst_8 = arith.constant 1.000000e+00 : f32
    %36 = vector.broadcast %cst_8 : f32 to vector<128x128xf32>
    %37 = arith.addf %35, %36 : vector<128x128xf32>
    %c0_9 = arith.constant 0 : index
    %38 = memref.load %arg1[%c0_9] : memref<1xf32, #tpu.memory_space<smem>>
    %39 = vector.broadcast %38 : f32 to vector<128x128xf32>
    %40 = arith.subf %39, %25 : vector<128x128xf32>
    %41 = vector.broadcast %38 : f32 to vector<128x128xf32>
    %42 = arith.addf %41, %37 : vector<128x128xf32>
    %43 = arith.subf %42, %25 : vector<128x128xf32>
    %44 = arith.divf %40, %43 : vector<128x128xf32>
    %cst_10 = arith.constant 1.000000e+00 : f32
    %45 = vector.broadcast %cst_10 : f32 to vector<128x128xf32>
    %46 = arith.subf %45, %44 : vector<128x128xf32>
    %cst_11 = arith.constant 0.000000e+00 : f32
    %47 = vector.broadcast %cst_11 : f32 to vector<128x128xf32>
    %48 = arith.cmpf oeq, %35, %47 : vector<128x128xf32>
    %49 = arith.extui %48 : vector<128x128xi1> to vector<128x128xi32>
    %50 = arith.sitofp %49 : vector<128x128xi32> to vector<128x128xf32>
    %51 = vector.broadcast %38 : f32 to vector<128x128xf32>
    %52 = arith.subf %51, %26 : vector<128x128xf32>
    %53 = vector.broadcast %38 : f32 to vector<128x128xf32>
    %54 = arith.addf %53, %35 : vector<128x128xf32>
    %55 = arith.subf %54, %26 : vector<128x128xf32>
    %56 = arith.addf %55, %50 : vector<128x128xf32>
    %57 = arith.divf %52, %56 : vector<128x128xf32>
    %cst_12 = arith.constant 1.000000e+00 : f32
    %58 = vector.broadcast %cst_12 : f32 to vector<128x128xf32>
    %59 = arith.subf %58, %57 : vector<128x128xf32>
    %cst_13 = arith.constant 1.000000e+00 : f32
    %60 = vector.broadcast %cst_13 : f32 to vector<128x128xf32>
    %61 = arith.subf %60, %50 : vector<128x128xf32>
    %62 = arith.mulf %59, %61 : vector<128x128xf32>
    %63 = arith.subf %46, %62 : vector<128x128xf32>
    %c0_14 = arith.constant 0 : index
    %c0_15 = arith.constant 0 : index
    %64 = vector.load %arg4[%c0_14, %c0_15] : memref<1x1xf32, #tpu.memory_space<vmem>>, vector<1x1xf32>
    %cst_16 = arith.constant 0.000000e+00 : f32
    %65 = vector.broadcast %cst_16 : f32 to vector<128x128xf32>
    %66 = arith.maximumf %3, %65 : vector<128x128xf32>
    %67 = arith.mulf %66, %63 : vector<128x128xf32>
    %68 = vector.shape_cast %67 : vector<128x128xf32> to vector<1x128x128xf32>
    %cst_17 = arith.constant dense<0.000000e+00> : vector<1xf32>
    %69 = vector.multi_reduction <add>, %68, %cst_17 [1, 2] : vector<1x128x128xf32> to vector<1xf32>
    %70 = vector.shape_cast %69 : vector<1xf32> to vector<1x1x1xf32>
    %71 = vector.extract %70[0, 0, 0] : f32 from vector<1x1x1xf32>
    %72 = vector.broadcast %71 : f32 to vector<1x1xf32>
    %73 = arith.addf %64, %72 : vector<1x1xf32>
    %c0_18 = arith.constant 0 : index
    %c0_19 = arith.constant 0 : index
    %74 = vector.load %arg4[%c0_18, %c0_19] : memref<1x1xf32, #tpu.memory_space<vmem>>, vector<1x1xf32>
    tpu.vector_store %arg4[%c0_18, %c0_19], %73 {strides = array<i32>} : memref<1x1xf32, #tpu.memory_space<vmem>>, vector<1x1xf32>,
    %75 = vector.extract_strided_slice %25 {offsets = [127, 127], sizes = [1, 1], strides = [1, 1]} : vector<128x128xf32> to vector<1x1xf32>
    %c0_20 = arith.constant 0 : index
    %c0_21 = arith.constant 0 : index
    %76 = vector.load %arg5[%c0_20, %c0_21] : memref<1x1xf32, #tpu.memory_space<vmem>>, vector<1x1xf32>
    tpu.vector_store %arg5[%c0_20, %c0_21], %75 {strides = array<i32>} : memref<1x1xf32, #tpu.memory_space<vmem>>, vector<1x1xf32>,
    return
  }
  func.func @transform_0(%arg0: i32) -> i32 {
    %c0_i32 = arith.constant 0 : i32
    %c0_i32_0 = arith.constant 0 : i32
    return %c0_i32 : i32
  }
  func.func @transform_1(%arg0: i32) -> (i32, i32) {
    %c0_i32 = arith.constant 0 : i32
    %c0_i32_0 = arith.constant 0 : i32
    return %arg0, %c0_i32 : i32, i32
  }
  func.func @transform_2(%arg0: i32) -> (i32, i32) {
    %c0_i32 = arith.constant 0 : i32
    %c0_i32_0 = arith.constant 0 : i32
    return %arg0, %c0_i32 : i32, i32
  }
  func.func @transform_3(%arg0: i32) -> (i32, i32) {
    %c0_i32 = arith.constant 0 : i32
    %c0_i32_0 = arith.constant 0 : i32
    %c0_i32_1 = arith.constant 0 : i32
    return %c0_i32, %c0_i32_0 : i32, i32
  }
}

</mosaic_0001>

<llo_original>
// kernel: neg.3
$region0: #{neg.3}
  #allocation0 [shape = 's32[1]{0}', space=sflag, size = 0x4, scoped, tag = 'scoped memory for neg.3']
  %s0 = inlined_call_operand.vmem [shape: f32[2048], index: 0, kind: input, shape index: {}]
  %s1 = inlined_call_operand.vmem [shape: f32[2048], index: 1, kind: output, shape index: {}]
  %v2 = vld [vmem:[%s0] sm:$0xff]
  %3 = xla_tuple %v2
  %4 = xla_tuple %3
  %v5 = vxor.u32 %v2, 2147483648
  %6 = xla_tuple %v5
  %7 = vst [vmem:[%s1] sm:$0xff] %v5
  %s8 = scalar_lea.vmem %s0, 8
  %v9 = vld [vmem:[%s8] sm:$0xff]
  %10 = xla_tuple %v9
  %11 = xla_tuple %10
  %v12 = vxor.u32 %v9, 2147483648
  %13 = xla_tuple %v12
  %s14 = scalar_lea.vmem %s1, 8
  %15 = vst [vmem:[%s14] sm:$0xff] %v12

// kernel: lovasz_hinge_loss.1
$region0: #{lovasz_hinge_loss.1}
  #allocation0 [shape = 'u32[]', space=smem, size = 0x4, offset = 0x4, fixed_abs, tag = 'smem constant byte address 0x4 - core index']
  #allocation1 [shape = 'u32[144,128]{1,0:T(1,128)}', space=vmem, size = 0x12000, scoped, tag = 'internal scratch']
  #allocation2 [shape = 'f32[1,1]{1,0:T(1,128)}', space=vmem, size = 0x200, scoped, tag = 'scratch operand']
  #allocation3 [shape = 'f32[1]{0:T(128)S(6)}', space=smem, size = 0x200, scoped, tag = 'scoped memory for lovasz_hinge_loss.1']
  %s0 = inlined_call_operand.<no memory space> [shape: f32[1], index: 0, kind: input, shape index: {}]
  %s1 = inlined_call_operand.vmem [shape: f32[128,128], index: 1, kind: input, shape index: {}]
  %s2 = inlined_call_operand.vmem [shape: f32[128,128], index: 2, kind: input, shape index: {}]
  %s3 = inlined_call_operand.hbm [shape: f32[1,1], index: 3, kind: output, shape index: {}]
  %s4 = sld [smem:[#allocation0]]
  $region26: #{lovasz_hinge_loss.1} parent=0
    _
  %s6 = ssub.s32 1, %s4
  %s7 = scalar_select 0, %s6, %s4
  %8 = sst [smem:[#allocation3]] %s0
  $region1: #{lovasz_hinge_loss.1} parent=0
    #allocation4 [shape = 'u8[512]{0}', space=vmem, size = 0x400, scoped, tag = 'output window, operand 0, single buffered']
    #allocation5 [shape = 's32[1]{0}', space=sflag, size = 0x4, scoped, tag = 'scoped memory for lovasz_hinge_loss.1']
    %9 = vsyncpa [#allocation5], 0
    // Predicated region
    $region2: #{lovasz_hinge_loss.1} parent=1 // pred_check
      _
    $region3: #{lovasz_hinge_loss.1} parent=1 // pred_check_branch
      %11 = sbr.rel (0) target = $region5
    $region4: #{lovasz_hinge_loss.1} parent=1 // pred_region
      _
    $region5: #{lovasz_hinge_loss.1} parent=1 // pred_fallthru
      _
    // Predicated region
    $region6: #{lovasz_hinge_loss.1} parent=1 // pred_check
      _
    $region7: #{lovasz_hinge_loss.1} parent=1 // pred_check_branch
      %13 = sbr.rel (0) target = $region9
    $region8: #{lovasz_hinge_loss.1} parent=1 // pred_region
      _
    $region9: #{lovasz_hinge_loss.1} parent=1 // pred_fallthru
      _
    // Predicated region
    $region10: #{lovasz_hinge_loss.1} parent=1 // pred_check
      _
    $region11: #{lovasz_hinge_loss.1} parent=1 // pred_check_branch
      %15 = sbr.rel (0) target = $region13
    $region12: #{lovasz_hinge_loss.1} parent=1 // pred_region
      _
    $region13: #{lovasz_hinge_loss.1} parent=1 // pred_fallthru
      _
    %p17 = scmp.eq.s32.totalorder 0, 0
    // Predicated region
    $region14: #{lovasz_hinge_loss.1} parent=1 // pred_check
      %p18 = pneg %p17
    $region15: #{lovasz_hinge_loss.1} parent=1 // pred_check_branch
      %20 = sbr.rel (%p18) target = $region17
    $region16: #{lovasz_hinge_loss.1} parent=1 // pred_region
      %vm21 = vcmask 0
      %22 = vst.msk [vmem:[#allocation4] sm:$0x1] %vm21, 0.0
      %23 = vst.msk [vmem:[#allocation2] sm:$0x1] %vm21, 0.0
    $region17: #{lovasz_hinge_loss.1} parent=1 // pred_fallthru
      _
    %v24 = vld [vmem:[%s1] sm:$0xff]
    %v25 = vld [vmem:[%s1 + $0x8] sm:$0xff]
    %v26 = vld [vmem:[%s1 + $0x10] sm:$0xff]
    %v27 = vld [vmem:[%s1 + $0x18] sm:$0xff]
    %v28 = vld [vmem:[%s1 + $0x20] sm:$0xff]
    %v29 = vld [vmem:[%s1 + $0x28] sm:$0xff]
    %v30 = vld [vmem:[%s1 + $0x30] sm:$0xff]
    %v31 = vld [vmem:[%s1 + $0x38] sm:$0xff]
    %v32 = vld [vmem:[%s1 + $0x40] sm:$0xff]
    %v33 = vld [vmem:[%s1 + $0x48] sm:$0xff]
    %v34 = vld [vmem:[%s1 + $0x50] sm:$0xff]
    %v35 = vld [vmem:[%s1 + $0x58] sm:$0xff]
    %v36 = vld [vmem:[%s1 + $0x60] sm:$0xff]
    %v37 = vld [vmem:[%s1 + $0x68] sm:$0xff]
    %v38 = vld [vmem:[%s1 + $0x70] sm:$0xff]
    %v39 = vld [vmem:[%s1 + $0x78] sm:$0xff]
    %v40 = vld [vmem:[%s2] sm:$0xff]
    %v41 = vld [vmem:[%s2 + $0x8] sm:$0xff]
    %v42 = vld [vmem:[%s2 + $0x10] sm:$0xff]
    %v43 = vld [vmem:[%s2 + $0x18] sm:$0xff]
    %v44 = vld [vmem:[%s2 + $0x20] sm:$0xff]
    %v45 = vld [vmem:[%s2 + $0x28] sm:$0xff]
    %v46 = vld [vmem:[%s2 + $0x30] sm:$0xff]
    %v47 = vld [vmem:[%s2 + $0x38] sm:$0xff]
    %v48 = vld [vmem:[%s2 + $0x40] sm:$0xff]
    %v49 = vld [vmem:[%s2 + $0x48] sm:$0xff]
    %v50 = vld [vmem:[%s2 + $0x50] sm:$0xff]
    %v51 = vld [vmem:[%s2 + $0x58] sm:$0xff]
    %v52 = vld [vmem:[%s2 + $0x60] sm:$0xff]
    %v53 = vld [vmem:[%s2 + $0x68] sm:$0xff]
    %v54 = vld [vmem:[%s2 + $0x70] sm:$0xff]
    %v55 = vld [vmem:[%s2 + $0x78] sm:$0xff]
    %v56 = vlaneseq
    %v57 = vshrl.u32 %v56, 7
    %v58 = vadd.s32 %v57, 8
    %v59 = vadd.s32 %v57, 16
    %v60 = vadd.s32 %v57, 24
    %v61 = vadd.s32 %v57, 32
    %v62 = vadd.s32 %v57, 40
    %v63 = vadd.s32 %v57, 48
    %v64 = vadd.s32 %v57, 56
    %v65 = vadd.s32 %v57, 64
    %v66 = vadd.s32 %v57, 72
    %v67 = vadd.s32 %v57, 80
    %v68 = vadd.s32 %v57, 88
    %v69 = vadd.s32 %v57, 96
    %v70 = vadd.s32 %v57, 104
    %v71 = vadd.s32 %v57, 112
    %v72 = vadd.s32 %v57, 120
    %v73 = vlaneseq
    %v74 = vand.u32 %v73, 127
    %vm75 = vcmp.le.s32.totalorder %v57, %v74
    %vm76 = vcmp.le.s32.totalorder %v58, %v74
    %vm77 = vcmp.le.s32.totalorder %v59, %v74
    %vm78 = vcmp.le.s32.totalorder %v60, %v74
    %vm79 = vcmp.le.s32.totalorder %v61, %v74
    %vm80 = vcmp.le.s32.totalorder %v62, %v74
    %vm81 = vcmp.le.s32.totalorder %v63, %v74
    %vm82 = vcmp.le.s32.totalorder %v64, %v74
    %vm83 = vcmp.le.s32.totalorder %v65, %v74
    %vm84 = vcmp.le.s32.totalorder %v66, %v74
    %vm85 = vcmp.le.s32.totalorder %v67, %v74
    %vm86 = vcmp.le.s32.totalorder %v68, %v74
    %vm87 = vcmp.le.s32.totalorder %v69, %v74
    %vm88 = vcmp.le.s32.totalorder %v70, %v74
    %vm89 = vcmp.le.s32.totalorder %v71, %v74
    %vm90 = vcmp.le.s32.totalorder %v72, %v74
    %v91 = vsel %vm75, 1, 0
    %v92 = vsel %vm76, 1, 0
    %v93 = vsel %vm77, 1, 0
    %v94 = vsel %vm78, 1, 0
    %v95 = vsel %vm79, 1, 0
    %v96 = vsel %vm80, 1, 0
    %v97 = vsel %vm81, 1, 0
    %v98 = vsel %vm82, 1, 0
    %v99 = vsel %vm83, 1, 0
    %v100 = vsel %vm84, 1, 0
    %v101 = vsel %vm85, 1, 0
    %v102 = vsel %vm86, 1, 0
    %v103 = vsel %vm87, 1, 0
    %v104 = vsel %vm88, 1, 0
    %v105 = vsel %vm89, 1, 0
    %v106 = vsel %vm90, 1, 0
    %v107 = vcvt.s32.f32 %v91
    %v108 = vcvt.s32.f32 %v92
    %v109 = vcvt.s32.f32 %v93
    %v110 = vcvt.s32.f32 %v94
    %v111 = vcvt.s32.f32 %v95
    %v112 = vcvt.s32.f32 %v96
    %v113 = vcvt.s32.f32 %v97
    %v114 = vcvt.s32.f32 %v98
    %v115 = vcvt.s32.f32 %v99
    %v116 = vcvt.s32.f32 %v100
    %v117 = vcvt.s32.f32 %v101
    %v118 = vcvt.s32.f32 %v102
    %v119 = vcvt.s32.f32 %v103
    %v120 = vcvt.s32.f32 %v104
    %v121 = vcvt.s32.f32 %v105
    %v122 = vcvt.s32.f32 %v106
    %v123 = vpack.c.bf16 %v108, %v107
    %v124 = vpack.c.bf16 %v110, %v109
    %v125 = vpack.c.bf16 %v112, %v111
    %v126 = vpack.c.bf16 %v114, %v113
    %v127 = vpack.c.bf16 %v116, %v115
    %v128 = vpack.c.bf16 %v118, %v117
    %v129 = vpack.c.bf16 %v120, %v119
    %v130 = vpack.c.bf16 %v122, %v121
    %vm131 = vcmp.lt.s32.totalorder %v74, %v57
    %vm132 = vcmp.lt.s32.totalorder %v74, %v58
    %vm133 = vcmp.lt.s32.totalorder %v74, %v59
    %vm134 = vcmp.lt.s32.totalorder %v74, %v60
    %vm135 = vcmp.lt.s32.totalorder %v74, %v61
    %vm136 = vcmp.lt.s32.totalorder %v74, %v62
    %vm137 = vcmp.lt.s32.totalorder %v74, %v63
    %vm138 = vcmp.lt.s32.totalorder %v74, %v64
    %vm139 = vcmp.lt.s32.totalorder %v74, %v65
    %vm140 = vcmp.lt.s32.totalorder %v74, %v66
    %vm141 = vcmp.lt.s32.totalorder %v74, %v67
    %vm142 = vcmp.lt.s32.totalorder %v74, %v68
    %vm143 = vcmp.lt.s32.totalorder %v74, %v69
    %vm144 = vcmp.lt.s32.totalorder %v74, %v70
    %vm145 = vcmp.lt.s32.totalorder %v74, %v71
    %vm146 = vcmp.lt.s32.totalorder %v74, %v72
    %v147 = vsel %vm131, 1, 0
    %v148 = vsel %vm132, 1, 0
    %v149 = vsel %vm133, 1, 0
    %v150 = vsel %vm134, 1, 0
    %v151 = vsel %vm135, 1, 0
    %v152 = vsel %vm136, 1, 0
    %v153 = vsel %vm137, 1, 0
    %v154 = vsel %vm138, 1, 0
    %v155 = vsel %vm139, 1, 0
    %v156 = vsel %vm140, 1, 0
    %v157 = vsel %vm141, 1, 0
    %v158 = vsel %vm142, 1, 0
    %v159 = vsel %vm143, 1, 0
    %v160 = vsel %vm144, 1, 0
    %v161 = vsel %vm145, 1, 0
    %v162 = vsel %vm146, 1, 0
    %v163 = vcvt.s32.f32 %v147
    %v164 = vcvt.s32.f32 %v148
    %v165 = vcvt.s32.f32 %v149
    %v166 = vcvt.s32.f32 %v150
    %v167 = vcvt.s32.f32 %v151
    %v168 = vcvt.s32.f32 %v152
    %v169 = vcvt.s32.f32 %v153
    %v170 = vcvt.s32.f32 %v154
    %v171 = vcvt.s32.f32 %v155
    %v172 = vcvt.s32.f32 %v156
    %v173 = vcvt.s32.f32 %v157
    %v174 = vcvt.s32.f32 %v158
    %v175 = vcvt.s32.f32 %v159
    %v176 = vcvt.s32.f32 %v160
    %v177 = vcvt.s32.f32 %v161
    %v178 = vcvt.s32.f32 %v162
    %v179 = vpack.c.bf16 %v164, %v163
    %v180 = vpack.c.bf16 %v166, %v165
    %v181 = vpack.c.bf16 %v168, %v167
    %v182 = vpack.c.bf16 %v170, %v169
    %v183 = vpack.c.bf16 %v172, %v171
    %v184 = vpack.c.bf16 %v174, %v173
    %v185 = vpack.c.bf16 %v176, %v175
    %v186 = vpack.c.bf16 %v178, %v177
    %v187 = vpack.c.bf16 %v41, %v40
    %v188 = vpack.c.bf16 %v43, %v42
    %v189 = vpack.c.bf16 %v45, %v44
    %v190 = vpack.c.bf16 %v47, %v46
    %v191 = vpack.c.bf16 %v49, %v48
    %v192 = vpack.c.bf16 %v51, %v50
    %v193 = vpack.c.bf16 %v53, %v52
    %v194 = vpack.c.bf16 %v55, %v54
    %195 = vmatprep.subr.bf16.mxu0 0
    %196 = vmatpush1.bf16.msra.mxu0 %v123
    %197 = vmatprep.subr.bf16.mxu0 0
    %198 = vmatpush1.bf16.msra.mxu0 %v124
    %199 = vmatprep.subr.bf16.mxu0 0
    %200 = vmatpush1.bf16.msra.mxu0 %v125
    %201 = vmatprep.subr.bf16.mxu0 0
    %202 = vmatpush1.bf16.msra.mxu0 %v126
    %203 = vmatprep.subr.bf16.mxu0 0
    %204 = vmatpush1.bf16.msra.mxu0 %v127
    %205 = vmatprep.subr.bf16.mxu0 0
    %206 = vmatpush1.bf16.msra.mxu0 %v128
    %207 = vmatprep.subr.bf16.mxu0 0
    %208 = vmatpush1.bf16.msra.mxu0 %v129
    %209 = vmatprep.subr.bf16.mxu0 0
    %210 = vmatpush1.bf16.msra.mxu0 %v130
    %211 = vmatprep.subr.bf16.mxu0 0
    %212 = vmatpush1.bf16.msra.mxu0 0
    %213 = vmatprep.subr.bf16.mxu0 0
    %214 = vmatpush1.bf16.msra.mxu0 0
    %215 = vmatprep.subr.bf16.mxu0 0
    %216 = vmatpush1.bf16.msra.mxu0 0
    %217 = vmatprep.subr.bf16.mxu0 0
    %218 = vmatpush1.bf16.msra.mxu0 0
    %219 = vmatprep.subr.bf16.mxu0 0
    %220 = vmatpush1.bf16.msra.mxu0 0
    %221 = vmatprep.subr.bf16.mxu0 0
    %222 = vmatpush1.bf16.msra.mxu0 0
    %223 = vmatprep.subr.bf16.mxu0 0
    %224 = vmatpush1.bf16.msra.mxu0 0
    %225 = vmatprep.subr.bf16.mxu0 0
    %226 = vmatpush1.bf16.msra.mxu0 0
    %227 = vmatprep.mubr.bf16.mxu0 0
    %228 = vmatmul.mubr.bf16.gmra.mrb[0].mxu0 %v187
    %v229 = vpop.f32.mrb[0].mxu0
    %v230 = vadd.f32 0.0, %v229
    %v231 = vpop.f32.mrb[0].mxu0
    %v232 = vpop.f32.mrb[0].mxu0
    %v233 = vadd.f32 0.0, %v232
    %v234 = vpop.f32.mrb[0].mxu0
    %235 = vmatprep.mubr.bf16.mxu0 0
    %236 = vmatmul.mubr.bf16.gmra.mrb[0].mxu0 %v188
    %v237 = vpop.f32.mrb[0].mxu0
    %v238 = vadd.f32 0.0, %v237
    %v239 = vpop.f32.mrb[0].mxu0
    %v240 = vpop.f32.mrb[0].mxu0
    %v241 = vadd.f32 0.0, %v240
    %v242 = vpop.f32.mrb[0].mxu0
    %243 = vmatprep.mubr.bf16.mxu0 0
    %244 = vmatmul.mubr.bf16.gmra.mrb[0].mxu0 %v189
    %v245 = vpop.f32.mrb[0].mxu0
    %v246 = vadd.f32 0.0, %v245
    %v247 = vpop.f32.mrb[0].mxu0
    %v248 = vpop.f32.mrb[0].mxu0
    %v249 = vadd.f32 0.0, %v248
    %v250 = vpop.f32.mrb[0].mxu0
    %251 = vmatprep.mubr.bf16.mxu0 0
    %252 = vmatmul.mubr.bf16.gmra.mrb[0].mxu0 %v190
    %v253 = vpop.f32.mrb[0].mxu0
    %v254 = vadd.f32 0.0, %v253
    %v255 = vpop.f32.mrb[0].mxu0
    %v256 = vpop.f32.mrb[0].mxu0
    %v257 = vadd.f32 0.0, %v256
    %v258 = vpop.f32.mrb[0].mxu0
    %259 = vmatprep.mubr.bf16.mxu0 0
    %260 = vmatmul.mubr.bf16.gmra.mrb[0].mxu0 %v191
    %v261 = vpop.f32.mrb[0].mxu0
    %v262 = vadd.f32 0.0, %v261
    %v263 = vpop.f32.mrb[0].mxu0
    %v264 = vpop.f32.mrb[0].mxu0
    %v265 = vadd.f32 0.0, %v264
    %v266 = vpop.f32.mrb[0].mxu0
    %267 = vmatprep.mubr.bf16.mxu0 0
    %268 = vmatmul.mubr.bf16.gmra.mrb[0].mxu0 %v192
    %v269 = vpop.f32.mrb[0].mxu0
    %v270 = vadd.f32 0.0, %v269
    %v271 = vpop.f32.mrb[0].mxu0
    %v272 = vpop.f32.mrb[0].mxu0
    %v273 = vadd.f32 0.0, %v272
    %v274 = vpop.f32.mrb[0].mxu0
    %275 = vmatprep.mubr.bf16.mxu0 0
    %276 = vmatmul.mubr.bf16.gmra.mrb[0].mxu0 %v193
    %v277 = vpop.f32.mrb[0].mxu0
    %v278 = vadd.f32 0.0, %v277
    %v279 = vpop.f32.mrb[0].mxu0
    %v280 = vpop.f32.mrb[0].mxu0
    %v281 = vadd.f32 0.0, %v280
    %v282 = vpop.f32.mrb[0].mxu0
    %283 = vmatprep.mubr.bf16.mxu0 0
    %284 = vmatmul.mubr.bf16.gmra.mrb[0].mxu0 %v194
    %v285 = vpop.f32.mrb[0].mxu0
    %v286 = vadd.f32 0.0, %v285
    %v287 = vpop.f32.mrb[0].mxu0
    %v288 = vpop.f32.mrb[0].mxu0
    %v289 = vadd.f32 0.0, %v288
    %v290 = vpop.f32.mrb[0].mxu0
    %291 = vdwg.mxu0
    %293 = vset.pattern.permute.xlu0 127
    %294 = vperm.xlu0 %293, %v230
    %v295 = vpop.permute.xlu0 %294
    %298 = vset.pattern.permute.xlu0 127
    %299 = vperm.xlu0 %298, %v233
    %v300 = vpop.permute.xlu0 %299
    %303 = vset.pattern.permute.xlu0 127
    %304 = vperm.xlu0 %303, %v238
    %v305 = vpop.permute.xlu0 %304
    %308 = vset.pattern.permute.xlu0 127
    %309 = vperm.xlu0 %308, %v241
    %v310 = vpop.permute.xlu0 %309
    %313 = vset.pattern.permute.xlu0 127
    %314 = vperm.xlu0 %313, %v246
    %v315 = vpop.permute.xlu0 %314
    %318 = vset.pattern.permute.xlu0 127
    %319 = vperm.xlu0 %318, %v249
    %v320 = vpop.permute.xlu0 %319
    %323 = vset.pattern.permute.xlu0 127
    %324 = vperm.xlu0 %323, %v254
    %v325 = vpop.permute.xlu0 %324
    %328 = vset.pattern.permute.xlu0 127
    %329 = vperm.xlu0 %328, %v257
    %v330 = vpop.permute.xlu0 %329
    %333 = vset.pattern.permute.xlu0 127
    %334 = vperm.xlu0 %333, %v262
    %v335 = vpop.permute.xlu0 %334
    %338 = vset.pattern.permute.xlu0 127
    %339 = vperm.xlu0 %338, %v265
    %v340 = vpop.permute.xlu0 %339
    %343 = vset.pattern.permute.xlu0 127
    %344 = vperm.xlu0 %343, %v270
    %v345 = vpop.permute.xlu0 %344
    %348 = vset.pattern.permute.xlu0 127
    %349 = vperm.xlu0 %348, %v273
    %v350 = vpop.permute.xlu0 %349
    %353 = vset.pattern.permute.xlu0 127
    %354 = vperm.xlu0 %353, %v278
    %v355 = vpop.permute.xlu0 %354
    %358 = vset.pattern.permute.xlu0 127
    %359 = vperm.xlu0 %358, %v281
    %v360 = vpop.permute.xlu0 %359
    %363 = vset.pattern.permute.xlu0 127
    %364 = vperm.xlu0 %363, %v286
    %v365 = vpop.permute.xlu0 %364
    %368 = vset.pattern.permute.xlu0 127
    %369 = vperm.xlu0 %368, %v289
    %v370 = vpop.permute.xlu0 %369
    %v372 = vpack.c.bf16 %v300, %v295
    %v373 = vpack.c.bf16 %v310, %v305
    %v374 = vpack.c.bf16 %v320, %v315
    %v375 = vpack.c.bf16 %v330, %v325
    %v376 = vpack.c.bf16 %v340, %v335
    %v377 = vpack.c.bf16 %v350, %v345
    %v378 = vpack.c.bf16 %v360, %v355
    %v379 = vpack.c.bf16 %v370, %v365
    %380 = vmatprep.subr.bf16.mxu0 0
    %381 = vmatpush1.bf16.msra.mxu0 %v372
    %382 = vmatprep.subr.bf16.mxu0 0
    %383 = vmatpush1.bf16.msra.mxu0 %v373
    %384 = vmatprep.subr.bf16.mxu0 0
    %385 = vmatpush1.bf16.msra.mxu0 %v374
    %386 = vmatprep.subr.bf16.mxu0 0
    %387 = vmatpush1.bf16.msra.mxu0 %v375
    %388 = vmatprep.subr.bf16.mxu0 0
    %389 = vmatpush1.bf16.msra.mxu0 %v376
    %390 = vmatprep.subr.bf16.mxu0 0
    %391 = vmatpush1.bf16.msra.mxu0 %v377
    %392 = vmatprep.subr.bf16.mxu0 0
    %393 = vmatpush1.bf16.msra.mxu0 %v378
    %394 = vmatprep.subr.bf16.mxu0 0
    %395 = vmatpush1.bf16.msra.mxu0 %v379
    %396 = vmatprep.subr.bf16.mxu0 0
    %397 = vmatpush1.bf16.msra.mxu0 0
    %398 = vmatprep.subr.bf16.mxu0 0
    %399 = vmatpush1.bf16.msra.mxu0 0
    %400 = vmatprep.subr.bf16.mxu0 0
    %401 = vmatpush1.bf16.msra.mxu0 0
    %402 = vmatprep.subr.bf16.mxu0 0
    %403 = vmatpush1.bf16.msra.mxu0 0
    %404 = vmatprep.subr.bf16.mxu0 0
    %405 = vmatpush1.bf16.msra.mxu0 0
    %406 = vmatprep.subr.bf16.mxu0 0
    %407 = vmatpush1.bf16.msra.mxu0 0
    %408 = vmatprep.subr.bf16.mxu0 0
    %409 = vmatpush1.bf16.msra.mxu0 0
    %410 = vmatprep.subr.bf16.mxu0 0
    %411 = vmatpush1.bf16.msra.mxu0 0
    %412 = vmatprep.mubr.bf16.mxu0 0
    %413 = vmatmul.mubr.bf16.gmra.mrb[0].mxu0 %v179
    %v414 = vpop.f32.mrb[0].mxu0
    %v415 = vadd.f32 0.0, %v414
    %v416 = vpop.f32.mrb[0].mxu0
    %v417 = vpop.f32.mrb[0].mxu0
    %v418 = vadd.f32 0.0, %v417
    %v419 = vpop.f32.mrb[0].mxu0
    %420 = vmatprep.mubr.bf16.mxu0 0
    %421 = vmatmul.mubr.bf16.gmra.mrb[0].mxu0 %v180
    %v422 = vpop.f32.mrb[0].mxu0
    %v423 = vadd.f32 0.0, %v422
    %v424 = vpop.f32.mrb[0].mxu0
    %v425 = vpop.f32.mrb[0].mxu0
    %v426 = vadd.f32 0.0, %v425
    %v427 = vpop.f32.mrb[0].mxu0
    %428 = vmatprep.mubr.bf16.mxu0 0
    %429 = vmatmul.mubr.bf16.gmra.mrb[0].mxu0 %v181
    %v430 = vpop.f32.mrb[0].mxu0
    %v431 = vadd.f32 0.0, %v430
    %v432 = vpop.f32.mrb[0].mxu0
    %v433 = vpop.f32.mrb[0].mxu0
    %v434 = vadd.f32 0.0, %v433
    %v435 = vpop.f32.mrb[0].mxu0
    %436 = vmatprep.mubr.bf16.mxu0 0
    %437 = vmatmul.mubr.bf16.gmra.mrb[0].mxu0 %v182
    %v438 = vpop.f32.mrb[0].mxu0
    %v439 = vadd.f32 0.0, %v438
    %v440 = vpop.f32.mrb[0].mxu0
    %v441 = vpop.f32.mrb[0].mxu0
    %v442 = vadd.f32 0.0, %v441
    %v443 = vpop.f32.mrb[0].mxu0
    %444 = vmatprep.mubr.bf16.mxu0 0
    %445 = vmatmul.mubr.bf16.gmra.mrb[0].mxu0 %v183
    %v446 = vpop.f32.mrb[0].mxu0
    %v447 = vadd.f32 0.0, %v446
    %v448 = vpop.f32.mrb[0].mxu0
    %v449 = vpop.f32.mrb[0].mxu0
    %v450 = vadd.f32 0.0, %v449
    %v451 = vpop.f32.mrb[0].mxu0
    %452 = vmatprep.mubr.bf16.mxu0 0
    %453 = vmatmul.mubr.bf16.gmra.mrb[0].mxu0 %v184
    %v454 = vpop.f32.mrb[0].mxu0
    %v455 = vadd.f32 0.0, %v454
    %v456 = vpop.f32.mrb[0].mxu0
    %v457 = vpop.f32.mrb[0].mxu0
    %v458 = vadd.f32 0.0, %v457
    %v459 = vpop.f32.mrb[0].mxu0
    %460 = vmatprep.mubr.bf16.mxu0 0
    %461 = vmatmul.mubr.bf16.gmra.mrb[0].mxu0 %v185
    %v462 = vpop.f32.mrb[0].mxu0
    %v463 = vadd.f32 0.0, %v462
    %v464 = vpop.f32.mrb[0].mxu0
    %v465 = vpop.f32.mrb[0].mxu0
    %v466 = vadd.f32 0.0, %v465
    %v467 = vpop.f32.mrb[0].mxu0
    %468 = vmatprep.mubr.bf16.mxu0 0
    %469 = vmatmul.mubr.bf16.gmra.mrb[0].mxu0 %v186
    %v470 = vpop.f32.mrb[0].mxu0
    %v471 = vadd.f32 0.0, %v470
    %v472 = vpop.f32.mrb[0].mxu0
    %v473 = vpop.f32.mrb[0].mxu0
    %v474 = vadd.f32 0.0, %v473
    %v475 = vpop.f32.mrb[0].mxu0
    %476 = vdwg.mxu0
    %v477 = vld [vmem:[#allocation2] sm:$0x1]
    %v479 = vlaneseq
    %v480 = vshrl.u32 %v479, 7
    %v481 = vsub.s32 0, %v480
    %v482 = vrot.slane %v477, %v481
    %483 = vset.pattern.permute.xlu0 0
    %484 = vperm.xlu0 %483, %v482
    %v485 = vpop.permute.xlu0 %484
    %v487 = vadd.f32 %v485, %v415
    %v488 = vadd.f32 %v485, %v418
    %v489 = vadd.f32 %v485, %v423
    %v490 = vadd.f32 %v485, %v426
    %v491 = vadd.f32 %v485, %v431
    %v492 = vadd.f32 %v485, %v434
    %v493 = vadd.f32 %v485, %v439
    %v494 = vadd.f32 %v485, %v442
    %v495 = vadd.f32 %v485, %v447
    %v496 = vadd.f32 %v485, %v450
    %v497 = vadd.f32 %v485, %v455
    %v498 = vadd.f32 %v485, %v458
    %v499 = vadd.f32 %v485, %v463
    %v500 = vadd.f32 %v485, %v466
    %v501 = vadd.f32 %v485, %v471
    %v502 = vadd.f32 %v485, %v474
    %v503 = vadd.f32 %v487, %v230
    %v504 = vadd.f32 %v488, %v233
    %v505 = vadd.f32 %v489, %v238
    %v506 = vadd.f32 %v490, %v241
    %v507 = vadd.f32 %v491, %v246
    %v508 = vadd.f32 %v492, %v249
    %v509 = vadd.f32 %v493, %v254
    %v510 = vadd.f32 %v494, %v257
    %v511 = vadd.f32 %v495, %v262
    %v512 = vadd.f32 %v496, %v265
    %v513 = vadd.f32 %v497, %v270
    %v514 = vadd.f32 %v498, %v273
    %v515 = vadd.f32 %v499, %v278
    %v516 = vadd.f32 %v500, %v281
    %v517 = vadd.f32 %v501, %v286
    %v518 = vadd.f32 %v502, %v289
    %v519 = vsub.f32 %v503, %v40
    %v520 = vsub.f32 %v504, %v41
    %v521 = vsub.f32 %v505, %v42
    %v522 = vsub.f32 %v506, %v43
    %v523 = vsub.f32 %v507, %v44
    %v524 = vsub.f32 %v508, %v45
    %v525 = vsub.f32 %v509, %v46
    %v526 = vsub.f32 %v510, %v47
    %v527 = vsub.f32 %v511, %v48
    %v528 = vsub.f32 %v512, %v49
    %v529 = vsub.f32 %v513, %v50
    %v530 = vsub.f32 %v514, %v51
    %v531 = vsub.f32 %v515, %v52
    %v532 = vsub.f32 %v516, %v53
    %v533 = vsub.f32 %v517, %v54
    %v534 = vsub.f32 %v518, %v55
    %s535 = smul.u32 0, 16384
    %s536 = scvt.s32.f32 %s535
    %v537 = vcvt.s32.f32 %v57
    %v538 = vcvt.s32.f32 %v58
    %v539 = vcvt.s32.f32 %v59
    %v540 = vcvt.s32.f32 %v60
    %v541 = vcvt.s32.f32 %v61
    %v542 = vcvt.s32.f32 %v62
    %v543 = vcvt.s32.f32 %v63
    %v544 = vcvt.s32.f32 %v64
    %v545 = vcvt.s32.f32 %v65
    %v546 = vcvt.s32.f32 %v66
    %v547 = vcvt.s32.f32 %v67
    %v548 = vcvt.s32.f32 %v68
    %v549 = vcvt.s32.f32 %v69
    %v550 = vcvt.s32.f32 %v70
    %v551 = vcvt.s32.f32 %v71
    %v552 = vcvt.s32.f32 %v72
    %v553 = vmul.f32 %v537, 128.0
    %v554 = vmul.f32 %v538, 128.0
    %v555 = vmul.f32 %v539, 128.0
    %v556 = vmul.f32 %v540, 128.0
    %v557 = vmul.f32 %v541, 128.0
    %v558 = vmul.f32 %v542, 128.0
    %v559 = vmul.f32 %v543, 128.0
    %v560 = vmul.f32 %v544, 128.0
    %v561 = vmul.f32 %v545, 128.0
    %v562 = vmul.f32 %v546, 128.0
    %v563 = vmul.f32 %v547, 128.0
    %v564 = vmul.f32 %v548, 128.0
    %v565 = vmul.f32 %v549, 128.0
    %v566 = vmul.f32 %v550, 128.0
    %v567 = vmul.f32 %v551, 128.0
    %v568 = vmul.f32 %v552, 128.0
    %v569 = vstv %s536
    %v570 = vadd.f32 %v569, %v553
    %v571 = vadd.f32 %v569, %v554
    %v572 = vadd.f32 %v569, %v555
    %v573 = vadd.f32 %v569, %v556
    %v574 = vadd.f32 %v569, %v557
    %v575 = vadd.f32 %v569, %v558
    %v576 = vadd.f32 %v569, %v559
    %v577 = vadd.f32 %v569, %v560
    %v578 = vadd.f32 %v569, %v561
    %v579 = vadd.f32 %v569, %v562
    %v580 = vadd.f32 %v569, %v563
    %v581 = vadd.f32 %v569, %v564
    %v582 = vadd.f32 %v569, %v565
    %v583 = vadd.f32 %v569, %v566
    %v584 = vadd.f32 %v569, %v567
    %v585 = vadd.f32 %v569, %v568
    %v586 = vcvt.s32.f32 %v74
    %v587 = vadd.f32 %v570, %v586
    %v588 = vadd.f32 %v571, %v586
    %v589 = vadd.f32 %v572, %v586
    %v590 = vadd.f32 %v573, %v586
    %v591 = vadd.f32 %v574, %v586
    %v592 = vadd.f32 %v575, %v586
    %v593 = vadd.f32 %v576, %v586
    %v594 = vadd.f32 %v577, %v586
    %v595 = vadd.f32 %v578, %v586
    %v596 = vadd.f32 %v579, %v586
    %v597 = vadd.f32 %v580, %v586
    %v598 = vadd.f32 %v581, %v586
    %v599 = vadd.f32 %v582, %v586
    %v600 = vadd.f32 %v583, %v586
    %v601 = vadd.f32 %v584, %v586
    %v602 = vadd.f32 %v585, %v586
    %v603 = vadd.f32 %v587, 1.0
    %v604 = vadd.f32 %v588, 1.0
    %v605 = vadd.f32 %v589, 1.0
    %v606 = vadd.f32 %v590, 1.0
    %v607 = vadd.f32 %v591, 1.0
    %v608 = vadd.f32 %v592, 1.0
    %v609 = vadd.f32 %v593, 1.0
    %v610 = vadd.f32 %v594, 1.0
    %v611 = vadd.f32 %v595, 1.0
    %v612 = vadd.f32 %v596, 1.0
    %v613 = vadd.f32 %v597, 1.0
    %v614 = vadd.f32 %v598, 1.0
    %v615 = vadd.f32 %v599, 1.0
    %v616 = vadd.f32 %v600, 1.0
    %v617 = vadd.f32 %v601, 1.0
    %v618 = vadd.f32 %v602, 1.0
    %s619 = sld [smem:[#allocation3]]
    %v620 = vstv %s619
    %v621 = vsub.f32 %v620, %v503
    %v622 = vsub.f32 %v620, %v504
    %v623 = vsub.f32 %v620, %v505
    %v624 = vsub.f32 %v620, %v506
    %v625 = vsub.f32 %v620, %v507
    %v626 = vsub.f32 %v620, %v508
    %v627 = vsub.f32 %v620, %v509
    %v628 = vsub.f32 %v620, %v510
    %v629 = vsub.f32 %v620, %v511
    %v630 = vsub.f32 %v620, %v512
    %v631 = vsub.f32 %v620, %v513
    %v632 = vsub.f32 %v620, %v514
    %v633 = vsub.f32 %v620, %v515
    %v634 = vsub.f32 %v620, %v516
    %v635 = vsub.f32 %v620, %v517
    %v636 = vsub.f32 %v620, %v518
    %v637 = vadd.f32 %v620, %v603
    %v638 = vadd.f32 %v620, %v604
    %v639 = vadd.f32 %v620, %v605
    %v640 = vadd.f32 %v620, %v606
    %v641 = vadd.f32 %v620, %v607
    %v642 = vadd.f32 %v620, %v608
    %v643 = vadd.f32 %v620, %v609
    %v644 = vadd.f32 %v620, %v610
    %v645 = vadd.f32 %v620, %v611
    %v646 = vadd.f32 %v620, %v612
    %v647 = vadd.f32 %v620, %v613
    %v648 = vadd.f32 %v620, %v614
    %v649 = vadd.f32 %v620, %v615
    %v650 = vadd.f32 %v620, %v616
    %v651 = vadd.f32 %v620, %v617
    %v652 = vadd.f32 %v620, %v618
    %v653 = vsub.f32 %v637, %v503
    %v654 = vsub.f32 %v638, %v504
    %v655 = vsub.f32 %v639, %v505
    %v656 = vsub.f32 %v640, %v506
    %v657 = vsub.f32 %v641, %v507
    %v658 = vsub.f32 %v642, %v508
    %v659 = vsub.f32 %v643, %v509
    %v660 = vsub.f32 %v644, %v510
    %v661 = vsub.f32 %v645, %v511
    %v662 = vsub.f32 %v646, %v512
    %v663 = vsub.f32 %v647, %v513
    %v664 = vsub.f32 %v648, %v514
    %v665 = vsub.f32 %v649, %v515
    %v666 = vsub.f32 %v650, %v516
    %v667 = vsub.f32 %v651, %v517
    %v668 = vsub.f32 %v652, %v518
    %v669 = vrcp.pop %v653
    %v670 = vmul.f32 %v621, %v669
    %v671 = vrcp.pop %v654
    %v672 = vmul.f32 %v622, %v671
    %v673 = vrcp.pop %v655
    %v674 = vmul.f32 %v623, %v673
    %v675 = vrcp.pop %v656
    %v676 = vmul.f32 %v624, %v675
    %v677 = vrcp.pop %v657
    %v678 = vmul.f32 %v625, %v677
    %v679 = vrcp.pop %v658
    %v680 = vmul.f32 %v626, %v679
    %v681 = vrcp.pop %v659
    %v682 = vmul.f32 %v627, %v681
    %v683 = vrcp.pop %v660
    %v684 = vmul.f32 %v628, %v683
    %v685 = vrcp.pop %v661
    %v686 = vmul.f32 %v629, %v685
    %v687 = vrcp.pop %v662
    %v688 = vmul.f32 %v630, %v687
    %v689 = vrcp.pop %v663
    %v690 = vmul.f32 %v631, %v689
    %v691 = vrcp.pop %v664
    %v692 = vmul.f32 %v632, %v691
    %v693 = vrcp.pop %v665
    %v694 = vmul.f32 %v633, %v693
    %v695 = vrcp.pop %v666
    %v696 = vmul.f32 %v634, %v695
    %v697 = vrcp.pop %v667
    %v698 = vmul.f32 %v635, %v697
    %v699 = vrcp.pop %v668
    %v700 = vmul.f32 %v636, %v699
    %v701 = vsub.f32 1.0, %v670
    %v702 = vsub.f32 1.0, %v672
    %v703 = vsub.f32 1.0, %v674
    %v704 = vsub.f32 1.0, %v676
    %v705 = vsub.f32 1.0, %v678
    %v706 = vsub.f32 1.0, %v680
    %v707 = vsub.f32 1.0, %v682
    %v708 = vsub.f32 1.0, %v684
    %v709 = vsub.f32 1.0, %v686
    %v710 = vsub.f32 1.0, %v688
    %v711 = vsub.f32 1.0, %v690
    %v712 = vsub.f32 1.0, %v692
    %v713 = vsub.f32 1.0, %v694
    %v714 = vsub.f32 1.0, %v696
    %v715 = vsub.f32 1.0, %v698
    %v716 = vsub.f32 1.0, %v700
    %vm717 = vcmp.eq.f32.partialorder %v587, 0.0
    %vm718 = vcmp.eq.f32.partialorder %v588, 0.0
    %vm719 = vcmp.eq.f32.partialorder %v589, 0.0
    %vm720 = vcmp.eq.f32.partialorder %v590, 0.0
    %vm721 = vcmp.eq.f32.partialorder %v591, 0.0
    %vm722 = vcmp.eq.f32.partialorder %v592, 0.0
    %vm723 = vcmp.eq.f32.partialorder %v593, 0.0
    %vm724 = vcmp.eq.f32.partialorder %v594, 0.0
    %vm725 = vcmp.eq.f32.partialorder %v595, 0.0
    %vm726 = vcmp.eq.f32.partialorder %v596, 0.0
    %vm727 = vcmp.eq.f32.partialorder %v597, 0.0
    %vm728 = vcmp.eq.f32.partialorder %v598, 0.0
    %vm729 = vcmp.eq.f32.partialorder %v599, 0.0
    %vm730 = vcmp.eq.f32.partialorder %v600, 0.0
    %vm731 = vcmp.eq.f32.partialorder %v601, 0.0
    %vm732 = vcmp.eq.f32.partialorder %v602, 0.0
    %v733 = vsel %vm717, 1, 0
    %v734 = vsel %vm718, 1, 0
    %v735 = vsel %vm719, 1, 0
    %v736 = vsel %vm720, 1, 0
    %v737 = vsel %vm721, 1, 0
    %v738 = vsel %vm722, 1, 0
    %v739 = vsel %vm723, 1, 0
    %v740 = vsel %vm724, 1, 0
    %v741 = vsel %vm725, 1, 0
    %v742 = vsel %vm726, 1, 0
    %v743 = vsel %vm727, 1, 0
    %v744 = vsel %vm728, 1, 0
    %v745 = vsel %vm729, 1, 0
    %v746 = vsel %vm730, 1, 0
    %v747 = vsel %vm731, 1, 0
    %v748 = vsel %vm732, 1, 0
    %v749 = vcvt.s32.f32 %v733
    %v750 = vcvt.s32.f32 %v734
    %v751 = vcvt.s32.f32 %v735
    %v752 = vcvt.s32.f32 %v736
    %v753 = vcvt.s32.f32 %v737
    %v754 = vcvt.s32.f32 %v738
    %v755 = vcvt.s32.f32 %v739
    %v756 = vcvt.s32.f32 %v740
    %v757 = vcvt.s32.f32 %v741
    %v758 = vcvt.s32.f32 %v742
    %v759 = vcvt.s32.f32 %v743
    %v760 = vcvt.s32.f32 %v744
    %v761 = vcvt.s32.f32 %v745
    %v762 = vcvt.s32.f32 %v746
    %v763 = vcvt.s32.f32 %v747
    %v764 = vcvt.s32.f32 %v748
    %v765 = vsub.f32 %v620, %v519
    %v766 = vsub.f32 %v620, %v520
    %v767 = vsub.f32 %v620, %v521
    %v768 = vsub.f32 %v620, %v522
    %v769 = vsub.f32 %v620, %v523
    %v770 = vsub.f32 %v620, %v524
    %v771 = vsub.f32 %v620, %v525
    %v772 = vsub.f32 %v620, %v526
    %v773 = vsub.f32 %v620, %v527
    %v774 = vsub.f32 %v620, %v528
    %v775 = vsub.f32 %v620, %v529
    %v776 = vsub.f32 %v620, %v530
    %v777 = vsub.f32 %v620, %v531
    %v778 = vsub.f32 %v620, %v532
    %v779 = vsub.f32 %v620, %v533
    %v780 = vsub.f32 %v620, %v534
    %v781 = vadd.f32 %v620, %v587
    %v782 = vadd.f32 %v620, %v588
    %v783 = vadd.f32 %v620, %v589
    %v784 = vadd.f32 %v620, %v590
    %v785 = vadd.f32 %v620, %v591
    %v786 = vadd.f32 %v620, %v592
    %v787 = vadd.f32 %v620, %v593
    %v788 = vadd.f32 %v620, %v594
    %v789 = vadd.f32 %v620, %v595
    %v790 = vadd.f32 %v620, %v596
    %v791 = vadd.f32 %v620, %v597
    %v792 = vadd.f32 %v620, %v598
    %v793 = vadd.f32 %v620, %v599
    %v794 = vadd.f32 %v620, %v600
    %v795 = vadd.f32 %v620, %v601
    %v796 = vadd.f32 %v620, %v602
    %v797 = vsub.f32 %v781, %v519
    %v798 = vsub.f32 %v782, %v520
    %v799 = vsub.f32 %v783, %v521
    %v800 = vsub.f32 %v784, %v522
    %v801 = vsub.f32 %v785, %v523
    %v802 = vsub.f32 %v786, %v524
    %v803 = vsub.f32 %v787, %v525
    %v804 = vsub.f32 %v788, %v526
    %v805 = vsub.f32 %v789, %v527
    %v806 = vsub.f32 %v790, %v528
    %v807 = vsub.f32 %v791, %v529
    %v808 = vsub.f32 %v792, %v530
    %v809 = vsub.f32 %v793, %v531
    %v810 = vsub.f32 %v794, %v532
    %v811 = vsub.f32 %v795, %v533
    %v812 = vsub.f32 %v796, %v534
    %v813 = vadd.f32 %v797, %v749
    %v814 = vadd.f32 %v798, %v750
    %v815 = vadd.f32 %v799, %v751
    %v816 = vadd.f32 %v800, %v752
    %v817 = vadd.f32 %v801, %v753
    %v818 = vadd.f32 %v802, %v754
    %v819 = vadd.f32 %v803, %v755
    %v820 = vadd.f32 %v804, %v756
    %v821 = vadd.f32 %v805, %v757
    %v822 = vadd.f32 %v806, %v758
    %v823 = vadd.f32 %v807, %v759
    %v824 = vadd.f32 %v808, %v760
    %v825 = vadd.f32 %v809, %v761
    %v826 = vadd.f32 %v810, %v762
    %v827 = vadd.f32 %v811, %v763
    %v828 = vadd.f32 %v812, %v764
    %v829 = vrcp.pop %v813
    %v830 = vmul.f32 %v765, %v829
    %v831 = vrcp.pop %v814
    %v832 = vmul.f32 %v766, %v831
    %v833 = vrcp.pop %v815
    %v834 = vmul.f32 %v767, %v833
    %v835 = vrcp.pop %v816
    %v836 = vmul.f32 %v768, %v835
    %v837 = vrcp.pop %v817
    %v838 = vmul.f32 %v769, %v837
    %v839 = vrcp.pop %v818
    %v840 = vmul.f32 %v770, %v839
    %v841 = vrcp.pop %v819
    %v842 = vmul.f32 %v771, %v841
    %v843 = vrcp.pop %v820
    %v844 = vmul.f32 %v772, %v843
    %v845 = vrcp.pop %v821
    %v846 = vmul.f32 %v773, %v845
    %v847 = vrcp.pop %v822
    %v848 = vmul.f32 %v774, %v847
    %v849 = vrcp.pop %v823
    %v850 = vmul.f32 %v775, %v849
    %v851 = vrcp.pop %v824
    %v852 = vmul.f32 %v776, %v851
    %v853 = vrcp.pop %v825
    %v854 = vmul.f32 %v777, %v853
    %v855 = vrcp.pop %v826
    %v856 = vmul.f32 %v778, %v855
    %v857 = vrcp.pop %v827
    %v858 = vmul.f32 %v779, %v857
    %v859 = vrcp.pop %v828
    %v860 = vmul.f32 %v780, %v859
    %v861 = vsub.f32 1.0, %v830
    %v862 = vsub.f32 1.0, %v832
    %v863 = vsub.f32 1.0, %v834
    %v864 = vsub.f32 1.0, %v836
    %v865 = vsub.f32 1.0, %v838
    %v866 = vsub.f32 1.0, %v840
    %v867 = vsub.f32 1.0, %v842
    %v868 = vsub.f32 1.0, %v844
    %v869 = vsub.f32 1.0, %v846
    %v870 = vsub.f32 1.0, %v848
    %v871 = vsub.f32 1.0, %v850
    %v872 = vsub.f32 1.0, %v852
    %v873 = vsub.f32 1.0, %v854
    %v874 = vsub.f32 1.0, %v856
    %v875 = vsub.f32 1.0, %v858
    %v876 = vsub.f32 1.0, %v860
    %v877 = vsub.f32 1.0, %v749
    %v878 = vsub.f32 1.0, %v750
    %v879 = vsub.f32 1.0, %v751
    %v880 = vsub.f32 1.0, %v752
    %v881 = vsub.f32 1.0, %v753
    %v882 = vsub.f32 1.0, %v754
    %v883 = vsub.f32 1.0, %v755
    %v884 = vsub.f32 1.0, %v756
    %v885 = vsub.f32 1.0, %v757
    %v886 = vsub.f32 1.0, %v758
    %v887 = vsub.f32 1.0, %v759
    %v888 = vsub.f32 1.0, %v760
    %v889 = vsub.f32 1.0, %v761
    %v890 = vsub.f32 1.0, %v762
    %v891 = vsub.f32 1.0, %v763
    %v892 = vsub.f32 1.0, %v764
    %v893 = vmul.f32 %v861, %v877
    %v894 = vmul.f32 %v862, %v878
    %v895 = vmul.f32 %v863, %v879
    %v896 = vmul.f32 %v864, %v880
    %v897 = vmul.f32 %v865, %v881
    %v898 = vmul.f32 %v866, %v882
    %v899 = vmul.f32 %v867, %v883
    %v900 = vmul.f32 %v868, %v884
    %v901 = vmul.f32 %v869, %v885
    %v902 = vmul.f32 %v870, %v886
    %v903 = vmul.f32 %v871, %v887
    %v904 = vmul.f32 %v872, %v888
    %v905 = vmul.f32 %v873, %v889
    %v906 = vmul.f32 %v874, %v890
    %v907 = vmul.f32 %v875, %v891
    %v908 = vmul.f32 %v876, %v892
    %v909 = vsub.f32 %v701, %v893
    %v910 = vsub.f32 %v702, %v894
    %v911 = vsub.f32 %v703, %v895
    %v912 = vsub.f32 %v704, %v896
    %v913 = vsub.f32 %v705, %v897
    %v914 = vsub.f32 %v706, %v898
    %v915 = vsub.f32 %v707, %v899
    %v916 = vsub.f32 %v708, %v900
    %v917 = vsub.f32 %v709, %v901
    %v918 = vsub.f32 %v710, %v902
    %v919 = vsub.f32 %v711, %v903
    %v920 = vsub.f32 %v712, %v904
    %v921 = vsub.f32 %v713, %v905
    %v922 = vsub.f32 %v714, %v906
    %v923 = vsub.f32 %v715, %v907
    %v924 = vsub.f32 %v716, %v908
    %v925 = vld [vmem:[#allocation4] sm:$0x1]
    %v926 = vmax.f32 %v24, 0.0
    %v927 = vmax.f32 %v25, 0.0
    %v928 = vmax.f32 %v26, 0.0
    %v929 = vmax.f32 %v27, 0.0
    %v930 = vmax.f32 %v28, 0.0
    %v931 = vmax.f32 %v29, 0.0
    %v932 = vmax.f32 %v30, 0.0
    %v933 = vmax.f32 %v31, 0.0
    %v934 = vmax.f32 %v32, 0.0
    %v935 = vmax.f32 %v33, 0.0
    %v936 = vmax.f32 %v34, 0.0
    %v937 = vmax.f32 %v35, 0.0
    %v938 = vmax.f32 %v36, 0.0
    %v939 = vmax.f32 %v37, 0.0
    %v940 = vmax.f32 %v38, 0.0
    %v941 = vmax.f32 %v39, 0.0
    %v942 = vmul.f32 %v926, %v909
    %v943 = vmul.f32 %v927, %v910
    %v944 = vmul.f32 %v928, %v911
    %v945 = vmul.f32 %v929, %v912
    %v946 = vmul.f32 %v930, %v913
    %v947 = vmul.f32 %v931, %v914
    %v948 = vmul.f32 %v932, %v915
    %v949 = vmul.f32 %v933, %v916
    %v950 = vmul.f32 %v934, %v917
    %v951 = vmul.f32 %v935, %v918
    %v952 = vmul.f32 %v936, %v919
    %v953 = vmul.f32 %v937, %v920
    %v954 = vmul.f32 %v938, %v921
    %v955 = vmul.f32 %v939, %v922
    %v956 = vmul.f32 %v940, %v923
    %v957 = vmul.f32 %v941, %v924
    %v958 = vadd.f32 %v942, %v943
    %v959 = vadd.f32 %v958, %v944
    %v960 = vadd.f32 %v959, %v945
    %v961 = vadd.f32 %v960, %v946
    %v962 = vadd.f32 %v961, %v947
    %v963 = vadd.f32 %v962, %v948
    %v964 = vadd.f32 %v963, %v949
    %v965 = vadd.f32 %v964, %v950
    %v966 = vadd.f32 %v965, %v951
    %v967 = vadd.f32 %v966, %v952
    %v968 = vadd.f32 %v967, %v953
    %v969 = vadd.f32 %v968, %v954
    %v970 = vadd.f32 %v969, %v955
    %v971 = vadd.f32 %v970, %v956
    %v972 = vadd.f32 %v971, %v957
    %973 = vadd.xlane.f32.xlu0 %v972
    %v974 = vpop.xlane.xlu0 %973
    %v975 = vrot.slane %v974, 4
    %v976 = vadd.f32 %v974, %v975
    %v977 = vrot.slane %v976, 2
    %v978 = vadd.f32 %v976, %v977
    %v979 = vrot.slane %v978, 1
    %v980 = vadd.f32 %v978, %v979
    %s981 = vtos %v980
    %v982 = vstv %s981
    %v983 = vadd.f32 %v925, %v982
    %vm984 = vcmask 0
    %985 = vst.msk [vmem:[#allocation4] sm:$0x1] %vm984, %v983
    %987 = vrot.lane.b32.xlu0 %v518, 1
    %v988 = vpop.permute.xlu0 %987
    %vm990 = vcmask 7175
    %991 = vst.msk [vmem:[#allocation2 - $0x7] sm:$0x80] %vm990, %v988
    // Predicated region
    $region18: #{lovasz_hinge_loss.1} parent=1 // pred_check
      _
    $region19: #{lovasz_hinge_loss.1} parent=1 // pred_check_branch
      %993 = sbr.rel (0) target = $region21
    $region20: #{lovasz_hinge_loss.1} parent=1 // pred_region
      %s995 = ssub.s32 16, 16
      %996 = vsyncadd [#allocation5], %s995
      %s998 = sshll.u32 [#allocation4], 4
      %s999 = int_to_ptr.vmem [resolvable:$true] %s998
      %1001 = dma.vmem_to_hbm [thread:$0]  %s999, 16, %s3, [#allocation5]
    $region21: #{lovasz_hinge_loss.1} parent=1 // pred_fallthru
      _
    // Predicated region
    $region22: #{lovasz_hinge_loss.1} parent=1 // pred_check
      _
    $region23: #{lovasz_hinge_loss.1} parent=1 // pred_check_branch
      %1003 = sbr.rel (0) target = $region25
    $region24: #{lovasz_hinge_loss.1} parent=1 // pred_region
      %1004 = dma.done [#allocation5], 16
    $region25: #{lovasz_hinge_loss.1} parent=1 // pred_fallthru
      _
    %1005 = vsyncpa [#allocation5], 1

</llo_original>
